<compile_context>
chip_gen: v5e
topology: v5e:2x2
jax: 0.10.0
libtpu: 0.0.40
codegen_flags: <defaults>
</compile_context>

<pallas_src>
import functools
import math

import numpy as np
import jax
import jax.numpy as jnp
from jax.experimental import pallas as pl
from jax.experimental.pallas import tpu as pltpu

LOG_STD_MAX = 2.0
LOG_STD_MIN = -20.0
_HALF_LOG_2PI = 0.5 * math.log(2.0 * math.pi)
_LOG_2 = math.log(2.0)


def _round_up(x, m):
    return (x + m - 1) // m * m


def _cdiv(a, b):
    return -(-a // b)


def _softplus(x):
    # Single-branch, numerically stable softplus: max(x,0) + log1p(exp(-|x|)).
    return jnp.maximum(x, 0.0) + jnp.log1p(jnp.exp(-jnp.abs(x)))


def actor_kernel(obs_ref, w1_ref, b1_ref, w2_ref, b2_ref, wh_ref, bh_ref,
                 eps_ref, out_ref, *, act_dim, head_pad, act_limit):
    tb, out_w = out_ref.shape

    # --- MLP trunk: two hidden layers, ReLU activations + ReLU output act ---
    w1 = w1_ref[...]
    h = jnp.maximum(
        jnp.dot(obs_ref[...].astype(w1.dtype), w1,
                preferred_element_type=jnp.float32) + b1_ref[...], 0.0)
    w2 = w2_ref[...]
    h = jnp.maximum(
        jnp.dot(h.astype(w2.dtype), w2,
                preferred_element_type=jnp.float32) + b2_ref[...], 0.0)

    # --- fused mu | log_std head: one MXU pass, lane-aligned slices ---------
    # mu lives in lanes [0, head_pad), log_std in [head_pad, 2*head_pad);
    # head_pad is a multiple of 128 so both slices are vreg-aligned (no XLU
    # relayout). Pad lanes carry zero weights/bias -> mu_pad = 0,
    # log_std_pad = 0 (std_pad = 1).
    wh = wh_ref[...]
    head = jnp.dot(h.astype(wh.dtype), wh,
                   preferred_element_type=jnp.float32) + bh_ref[...]
    mu = head[:, :head_pad]
    log_std = jnp.clip(head[:, head_pad:], LOG_STD_MIN, LOG_STD_MAX)
    std = jnp.exp(log_std)

    # --- reparameterized sample: pi = mu + std * eps (eps zero in pad lanes) -
    eps = eps_ref[...]
    pi = mu + std * eps

    # --- Normal log-prob + tanh correction, single masked lane reduce -------
    # Normal(mu,std).log_prob(pi) = -0.5*eps^2 - log_std - 0.5*log(2*pi)
    # correction                  = 2*(log(2) - pi - softplus(-2*pi))
    corr = 2.0 * (_LOG_2 - pi - _softplus(-2.0 * pi))
    terms = (-0.5 * eps * eps - log_std - _HALF_LOG_2PI) - corr
    lane_h = jax.lax.broadcasted_iota(jnp.int32, (tb, head_pad), 1)
    terms = jnp.where(lane_h < act_dim, terms, 0.0)          # mask pad lanes
    logp = jnp.sum(terms, axis=-1, keepdims=True)            # (tb, 1)

    # --- squash, scale, pack in-register, and store ONCE ---------------------
    action = act_limit * jnp.tanh(pi)                         # (tb, head_pad)
    if out_w > head_pad:                                      # static branch
        action = jnp.pad(action, ((0, 0), (0, out_w - head_pad)))
    lane = jax.lax.broadcasted_iota(jnp.int32, (tb, out_w), 1)
    packed = jnp.where(lane < act_dim, action,
                       jnp.where(lane == act_dim, logp, 0.0))
    out_ref[...] = packed                                     # single full store


def _generation_defaults():
    """(tile_b_max, vmem_cap_bytes, min_grid_steps) for the local TPU gen."""
    try:
        kind = jax.devices()[0].device_kind.lower()
    except Exception:
        kind = ""
    if "v7" in kind:
        # 64 MiB VMEM / TC, 2 TCs: keep <=48 MiB and guarantee >=2 grid steps.
        return 2048, 48 * 1024 * 1024, 2
    # v5e / v6e: 128 MiB VMEM, single TC.
    return 4096, 100 * 1024 * 1024, 1


def squashed_gaussian_actor(obs, params, eps, act_limit,
                            tile_b_max=None, use_bf16_matmul=False):
    """Actor forward pass as a single batch-tiled Pallas kernel.

    obs: [B, obs_dim] f32, eps: [B, act_dim] f32 standard-normal rsample noise.
    Returns (pi_action [B, act_dim], logp_pi [B]).
    use_bf16_matmul: bf16 MXU operands with f32 accumulation (full-rate on
    v5e / v6e / v7x; ~1e-2 relative error on logp).
    """
    B, obs_dim = obs.shape
    act_dim = int(params["wmu"].shape[1])
    h1 = int(params["w1"].shape[1])
    h2 = int(params["w2"].shape[1])

    gen_tile_b_max, vmem_cap, min_grid_steps = _generation_defaults()
    if tile_b_max is None:
        tile_b_max = gen_tile_b_max

    # Lane-aligned head layout: mu in [0, head_pad), log_std in [head_pad, 2*head_pad).
    head_pad = max(128, _round_up(act_dim, 128))
    # Packed output: action in lanes [0, act_dim), logp in lane act_dim.
    out_w = head_pad if act_dim + 1 <= head_pad else head_pad + 128

    # --- batch tiling (gen-aware: big tiles, but >=2 steps on v7x) ----------
    b_aligned = _round_up(B, 8)
    tile_b = min(int(tile_b_max), b_aligned)
    if min_grid_steps > 1:
        tile_b = min(tile_b, _round_up(_cdiv(b_aligned, min_grid_steps), 8))
    tile_b = max(8, tile_b)
    b_pad = _round_up(B, tile_b)
    grid = (b_pad // tile_b,)

    # --- wrapper-side padding / head fusion (once) ---------------------------
    obs_p = jnp.pad(obs, ((0, b_pad - B), (0, 0))) if b_pad != B else obs
    eps_p = jnp.pad(eps, ((0, b_pad - B), (0, head_pad - act_dim)))

    wh = jnp.zeros((h2, 2 * head_pad), jnp.float32)
    wh = wh.at[:, :act_dim].set(params["wmu"])
    wh = wh.at[:, head_pad:head_pad + act_dim].set(params["wls"])
    bh = jnp.zeros((1, 2 * head_pad), jnp.float32)
    bh = bh.at[:, :act_dim].set(params["bmu"])
    bh = bh.at[:, head_pad:head_pad + act_dim].set(params["bls"])

    w1, w2 = params["w1"], params["w2"]
    if use_bf16_matmul:  # bf16 MXU operands, f32 accumulation (all gens)
        w1, w2, wh = (w.astype(jnp.bfloat16) for w in (w1, w2, wh))

    kernel = functools.partial(actor_kernel, act_dim=act_dim,
                               head_pad=head_pad, act_limit=float(act_limit))

    def batch_spec(feat):
        return pl.BlockSpec((tile_b, feat), lambda i: (i, 0))

    def const_spec(r, c):
        # Constant index_map -> DMA'd once; single-buffered to halve VMEM held.
        return pl.BlockSpec((r, c), lambda i: (0, 0),
                            pipeline_mode=pl.Buffered(1))

    b1, b2 = params["b1"], params["b2"]

    # --- VMEM budget from actual buffer sizes, clamped per generation --------
    stream_bytes = tile_b * (obs_dim + head_pad + out_w) * 4
    weight_bytes = (w1.nbytes + w2.nbytes + wh.nbytes
                    + b1.nbytes + b2.nbytes + bh.nbytes)
    interm_bytes = tile_b * (h1 + h2 + 2 * head_pad) * 4
    vmem_est = 2 * stream_bytes + weight_bytes + 2 * interm_bytes + (4 << 20)
    vmem_limit = int(min(max(vmem_est, 16 << 20), vmem_cap))

    flops = (2 * b_pad * (obs_dim * h1 + h1 * h2 + h2 * 2 * head_pad)
             + 30 * b_pad * head_pad)
    transcendentals = 4 * b_pad * head_pad          # exp, exp, log1p, tanh
    bytes_accessed = (obs_p.nbytes + eps_p.nbytes + b_pad * out_w * 4
                      + weight_bytes)

    packed = pl.pallas_call(
        kernel,
        out_shape=jax.ShapeDtypeStruct((b_pad, out_w), jnp.float32),
        grid_spec=pltpu.PrefetchScalarGridSpec(
            num_scalar_prefetch=0,
            grid=grid,
            in_specs=[
                batch_spec(obs_dim),                          # obs   (streamed)
                const_spec(obs_dim, h1), const_spec(1, h1),   # W1, b1 (resident)
                const_spec(h1, h2), const_spec(1, h2),        # W2, b2 (resident)
                const_spec(h2, 2 * head_pad),                 # fused head W
                const_spec(1, 2 * head_pad),                  # fused head b
                batch_spec(head_pad),                         # eps  (streamed)
            ],
            out_specs=batch_spec(out_w),
        ),
        compiler_params=pltpu.CompilerParams(
            dimension_semantics=("parallel",),
            vmem_limit_bytes=vmem_limit),
        cost_estimate=pl.CostEstimate(
            flops=int(flops),
            transcendentals=int(transcendentals),
            bytes_accessed=int(bytes_accessed)),
    )(obs_p, w1, b1, w2, b2, wh, bh, eps_p)

    pi_action = packed[:B, :act_dim]
    logp_pi = packed[:B, act_dim]
    return pi_action, logp_pi


def init_params(key, obs_dim, hidden_sizes, act_dim):
    """Deterministic synthetic init, PyTorch-Linear-style uniform(±1/sqrt(fan_in))."""
    sizes = [obs_dim] + list(hidden_sizes)
    params = {}
    names = [("w1", "b1"), ("w2", "b2")]
    keys = jax.random.split(key, 8)
    k = 0
    for j, (wn, bn) in enumerate(names):
        fan_in = sizes[j]
        bound = 1.0 / float(np.sqrt(fan_in))
        params[wn] = jax.random.uniform(keys[k], (sizes[j], sizes[j + 1]),
                                        jnp.float32, -bound, bound); k += 1
        params[bn] = jax.random.uniform(keys[k], (1, sizes[j + 1]),
                                        jnp.float32, -bound, bound); k += 1
    fan_in = hidden_sizes[-1]
    bound = 1.0 / float(np.sqrt(fan_in))
    params["wmu"] = jax.random.uniform(keys[k], (fan_in, act_dim),
                                       jnp.float32, -bound, bound); k += 1
    params["bmu"] = jax.random.uniform(keys[k], (1, act_dim),
                                       jnp.float32, -bound, bound); k += 1
    params["wls"] = jax.random.uniform(keys[k], (fan_in, act_dim),
                                       jnp.float32, -bound, bound); k += 1
    params["bls"] = jax.random.uniform(keys[k], (1, act_dim),
                                       jnp.float32, -bound, bound); k += 1
    return params


def _reference_np(obs, params, eps, act_limit):
    """Pure-numpy float64 reference of the PyTorch forward pass."""
    o = np.asarray(obs, np.float64)
    e = np.asarray(eps, np.float64)
    p = {k: np.asarray(v, np.float64) for k, v in params.items()}
    h = np.maximum(o @ p["w1"] + p["b1"], 0.0)
    h = np.maximum(h @ p["w2"] + p["b2"], 0.0)
    mu = h @ p["wmu"] + p["bmu"]
    log_std = np.clip(h @ p["wls"] + p["bls"], LOG_STD_MIN, LOG_STD_MAX)
    std = np.exp(log_std)
    pi = mu + std * e
    logp = np.sum(-0.5 * e * e - log_std - _HALF_LOG_2PI, axis=-1)
    logp -= np.sum(2.0 * (_LOG_2 - pi - np.logaddexp(0.0, -2.0 * pi)), axis=-1)
    return act_limit * np.tanh(pi), logp


if __name__ == "__main__":
    obs_dim, act_dim = 16, 8
    hidden_sizes = (32, 32)
    act_limit = 1.0
    batch = 12  # not a multiple of 8 -> exercises the pad + unpack path

    root = jax.random.PRNGKey(0)
    k_param, k_obs, k_eps = jax.random.split(root, 3)

    params = init_params(k_param, obs_dim, hidden_sizes, act_dim)
    obs = jax.random.normal(k_obs, (batch, obs_dim), jnp.float32)
    eps = jax.random.normal(k_eps, (batch, act_dim), jnp.float32)  # rsample noise

    pi_action, logp_pi = squashed_gaussian_actor(obs, params, eps, act_limit)
    jax.block_until_ready((pi_action, logp_pi))

    assert pi_action.shape == (batch, act_dim)
    assert logp_pi.shape == (batch,)
    assert bool(jnp.all(jnp.abs(pi_action) <= act_limit + 1e-6))

    ref_act, ref_logp = _reference_np(obs, params, eps, act_limit)
    np.testing.assert_allclose(np.asarray(pi_action), ref_act, rtol=2e-2, atol=2e-2)
    np.testing.assert_allclose(np.asarray(logp_pi), ref_logp, rtol=2e-2, atol=2e-2)

    print("KERNEL_OK")
</pallas_src>

<mosaic_0001>
module attributes {stable_mosaic.version = 11 : i64} {
  func.func @actor_kernel(%arg0: i32, %arg1: memref<16x16xf32, #tpu.memory_space<vmem>>, %arg2: memref<16x32xf32, #tpu.memory_space<vmem>>, %arg3: memref<1x32xf32, #tpu.memory_space<vmem>>, %arg4: memref<32x32xf32, #tpu.memory_space<vmem>>, %arg5: memref<1x32xf32, #tpu.memory_space<vmem>>, %arg6: memref<32x256xf32, #tpu.memory_space<vmem>>, %arg7: memref<1x256xf32, #tpu.memory_space<vmem>>, %arg8: memref<16x128xf32, #tpu.memory_space<vmem>>, %arg9: memref<16x128xf32, #tpu.memory_space<vmem>>) attributes {dimension_semantics = [#tpu.dimension_semantics<parallel>], iteration_bounds = array<i64: 1>, scalar_prefetch = 0 : i64, scratch_operands = 0 : i64, tpu.core_type = #tpu.core_type<tc>, window_params = [{transform_indices = @transform_0, window_bounds = array<i64: 16, 16>}, {pipeline_mode = #tpu.pipeline_mode<synchronous>, transform_indices = @transform_1, window_bounds = array<i64: 16, 32>}, {pipeline_mode = #tpu.pipeline_mode<synchronous>, transform_indices = @transform_2, window_bounds = array<i64: 1, 32>}, {pipeline_mode = #tpu.pipeline_mode<synchronous>, transform_indices = @transform_3, window_bounds = array<i64: 32, 32>}, {pipeline_mode = #tpu.pipeline_mode<synchronous>, transform_indices = @transform_4, window_bounds = array<i64: 1, 32>}, {pipeline_mode = #tpu.pipeline_mode<synchronous>, transform_indices = @transform_5, window_bounds = array<i64: 32, 256>}, {pipeline_mode = #tpu.pipeline_mode<synchronous>, transform_indices = @transform_6, window_bounds = array<i64: 1, 256>}, {transform_indices = @transform_7, window_bounds = array<i64: 16, 128>}, {transform_indices = @transform_8, window_bounds = array<i64: 16, 128>}]} {
    %c0 = arith.constant 0 : index
    %c0_0 = arith.constant 0 : index
    %0 = vector.load %arg2[%c0, %c0_0] : memref<16x32xf32, #tpu.memory_space<vmem>>, vector<16x32xf32>
    %c0_1 = arith.constant 0 : index
    %c0_2 = arith.constant 0 : index
    %1 = vector.load %arg1[%c0_1, %c0_2] : memref<16x16xf32, #tpu.memory_space<vmem>>, vector<16x16xf32>
    %cst = arith.constant dense<0.000000e+00> : vector<16x32xf32>
    %2 = tpu.matmul %1, %0, %cst {dimension_numbers = #tpu.dot_dimension_numbers<[1], [0], [0], [1], [0, 0, 1, 1], [], []>} : vector<16x16xf32>, vector<16x32xf32>, vector<16x32xf32> -> vector<16x32xf32>
    %c0_3 = arith.constant 0 : index
    %c0_4 = arith.constant 0 : index
    %3 = vector.load %arg3[%c0_3, %c0_4] : memref<1x32xf32, #tpu.memory_space<vmem>>, vector<1x32xf32>
    %4 = vector.broadcast %3 : vector<1x32xf32> to vector<16x32xf32>
    %5 = arith.addf %2, %4 : vector<16x32xf32>
    %cst_5 = arith.constant 0.000000e+00 : f32
    %6 = vector.broadcast %cst_5 : f32 to vector<16x32xf32>
    %7 = arith.maximumf %5, %6 : vector<16x32xf32>
    %c0_6 = arith.constant 0 : index
    %c0_7 = arith.constant 0 : index
    %8 = vector.load %arg4[%c0_6, %c0_7] : memref<32x32xf32, #tpu.memory_space<vmem>>, vector<32x32xf32>
    %cst_8 = arith.constant dense<0.000000e+00> : vector<16x32xf32>
    %9 = tpu.matmul %7, %8, %cst_8 {dimension_numbers = #tpu.dot_dimension_numbers<[1], [0], [0], [1], [0, 0, 1, 1], [], []>} : vector<16x32xf32>, vector<32x32xf32>, vector<16x32xf32> -> vector<16x32xf32>
    %c0_9 = arith.constant 0 : index
    %c0_10 = arith.constant 0 : index
    %10 = vector.load %arg5[%c0_9, %c0_10] : memref<1x32xf32, #tpu.memory_space<vmem>>, vector<1x32xf32>
    %11 = vector.broadcast %10 : vector<1x32xf32> to vector<16x32xf32>
    %12 = arith.addf %9, %11 : vector<16x32xf32>
    %cst_11 = arith.constant 0.000000e+00 : f32
    %13 = vector.broadcast %cst_11 : f32 to vector<16x32xf32>
    %14 = arith.maximumf %12, %13 : vector<16x32xf32>
    %c0_12 = arith.constant 0 : index
    %c0_13 = arith.constant 0 : index
    %15 = vector.load %arg6[%c0_12, %c0_13] : memref<32x256xf32, #tpu.memory_space<vmem>>, vector<32x256xf32>
    %cst_14 = arith.constant dense<0.000000e+00> : vector<16x256xf32>
    %16 = tpu.matmul %14, %15, %cst_14 {dimension_numbers = #tpu.dot_dimension_numbers<[1], [0], [0], [1], [0, 0, 1, 1], [], []>} : vector<16x32xf32>, vector<32x256xf32>, vector<16x256xf32> -> vector<16x256xf32>
    %c0_15 = arith.constant 0 : index
    %c0_16 = arith.constant 0 : index
    %17 = vector.load %arg7[%c0_15, %c0_16] : memref<1x256xf32, #tpu.memory_space<vmem>>, vector<1x256xf32>
    %18 = vector.broadcast %17 : vector<1x256xf32> to vector<16x256xf32>
    %19 = arith.addf %16, %18 : vector<16x256xf32>
    %20 = vector.extract_strided_slice %19 {offsets = [0, 0], sizes = [16, 128], strides = [1, 1]} : vector<16x256xf32> to vector<16x128xf32>
    %21 = vector.extract_strided_slice %19 {offsets = [0, 128], sizes = [16, 128], strides = [1, 1]} : vector<16x256xf32> to vector<16x128xf32>
    %cst_17 = arith.constant -2.000000e+01 : f32
    %cst_18 = arith.constant 2.000000e+00 : f32
    %22 = vector.broadcast %cst_17 : f32 to vector<16x128xf32>
    %23 = arith.maximumf %22, %21 : vector<16x128xf32>
    %24 = vector.broadcast %cst_18 : f32 to vector<16x128xf32>
    %25 = arith.minimumf %24, %23 : vector<16x128xf32>
    %26 = math.exp %25 : vector<16x128xf32>
    %c0_19 = arith.constant 0 : index
    %c0_20 = arith.constant 0 : index
    %27 = vector.load %arg8[%c0_19, %c0_20] : memref<16x128xf32, #tpu.memory_space<vmem>>, vector<16x128xf32>
    %28 = arith.mulf %26, %27 : vector<16x128xf32>
    %29 = arith.addf %20, %28 : vector<16x128xf32>
    %cst_21 = arith.constant 0.693147182 : f32
    %30 = vector.broadcast %cst_21 : f32 to vector<16x128xf32>
    %31 = arith.subf %30, %29 : vector<16x128xf32>
    %cst_22 = arith.constant -2.000000e+00 : f32
    %32 = vector.broadcast %cst_22 : f32 to vector<16x128xf32>
    %33 = arith.mulf %32, %29 : vector<16x128xf32>
    %cst_23 = arith.constant 0.000000e+00 : f32
    %34 = vector.broadcast %cst_23 : f32 to vector<16x128xf32>
    %35 = arith.maximumf %33, %34 : vector<16x128xf32>
    %36 = math.absf %33 : vector<16x128xf32>
    %cst_24 = arith.constant 0.000000e+00 : f32
    %37 = vector.broadcast %cst_24 : f32 to vector<16x128xf32>
    %38 = arith.subf %37, %36 : vector<16x128xf32>
    %39 = math.exp %38 : vector<16x128xf32>
    %40 = math.log1p %39 : vector<16x128xf32>
    %41 = arith.addf %35, %40 : vector<16x128xf32>
    %42 = arith.subf %31, %41 : vector<16x128xf32>
    %cst_25 = arith.constant 2.000000e+00 : f32
    %43 = vector.broadcast %cst_25 : f32 to vector<16x128xf32>
    %44 = arith.mulf %43, %42 : vector<16x128xf32>
    %cst_26 = arith.constant -5.000000e-01 : f32
    %45 = vector.broadcast %cst_26 : f32 to vector<16x128xf32>
    %46 = arith.mulf %45, %27 : vector<16x128xf32>
    %47 = arith.mulf %46, %27 : vector<16x128xf32>
    %48 = arith.subf %47, %25 : vector<16x128xf32>
    %cst_27 = arith.constant 0.918938517 : f32
    %49 = vector.broadcast %cst_27 : f32 to vector<16x128xf32>
    %50 = arith.subf %48, %49 : vector<16x128xf32>
    %51 = arith.subf %50, %44 : vector<16x128xf32>
    %52 = tpu.iota {dimensions = array<i32: 1>} : vector<16x128xi32>
    %c8_i32 = arith.constant 8 : i32
    %53 = vector.broadcast %c8_i32 : i32 to vector<16x128xi32>
    %54 = arith.cmpi slt, %52, %53 : vector<16x128xi32>
    %cst_28 = arith.constant 0.000000e+00 : f32
    %55 = vector.broadcast %cst_28 : f32 to vector<16x128xf32>
    %56 = arith.select %54, %51, %55 : vector<16x128xi1>, vector<16x128xf32>
    %cst_29 = arith.constant dense<0.000000e+00> : vector<16xf32>
    %57 = vector.multi_reduction <add>, %56, %cst_29 [1] : vector<16x128xf32> to vector<16xf32>
    %58 = vector.shape_cast %57 : vector<16xf32> to vector<16x1xf32>
    %59 = math.tanh %29 : vector<16x128xf32>
    %cst_30 = arith.constant 1.000000e+00 : f32
    %60 = vector.broadcast %cst_30 : f32 to vector<16x128xf32>
    %61 = arith.mulf %60, %59 : vector<16x128xf32>
    %62 = tpu.iota {dimensions = array<i32: 1>} : vector<16x128xi32>
    %c8_i32_31 = arith.constant 8 : i32
    %63 = vector.broadcast %c8_i32_31 : i32 to vector<16x128xi32>
    %64 = arith.cmpi slt, %62, %63 : vector<16x128xi32>
    %c8_i32_32 = arith.constant 8 : i32
    %65 = vector.broadcast %c8_i32_32 : i32 to vector<16x128xi32>
    %66 = arith.cmpi eq, %62, %65 : vector<16x128xi32>
    %cst_33 = arith.constant 0.000000e+00 : f32
    %67 = vector.shape_cast %58 : vector<16x1xf32> to vector<16x1xf32>
    %68 = vector.broadcast %67 : vector<16x1xf32> to vector<16x128xf32>
    %69 = vector.broadcast %cst_33 : f32 to vector<16x128xf32>
    %70 = arith.select %66, %68, %69 : vector<16x128xi1>, vector<16x128xf32>
    %71 = arith.select %64, %61, %70 : vector<16x128xi1>, vector<16x128xf32>
    %c0_34 = arith.constant 0 : index
    %c0_35 = arith.constant 0 : index
    %72 = vector.load %arg9[%c0_34, %c0_35] : memref<16x128xf32, #tpu.memory_space<vmem>>, vector<16x128xf32>
    tpu.vector_store %arg9[%c0_34, %c0_35], %71 {strides = array<i32>} : memref<16x128xf32, #tpu.memory_space<vmem>>, vector<16x128xf32>,
    return
  }
  func.func @transform_0(%arg0: i32) -> (i32, i32) {
    %c0_i32 = arith.constant 0 : i32
    %c0_i32_0 = arith.constant 0 : i32
    return %arg0, %c0_i32 : i32, i32
  }
  func.func @transform_1(%arg0: i32) -> (i32, i32) {
    %c0_i32 = arith.constant 0 : i32
    %c0_i32_0 = arith.constant 0 : i32
    %c0_i32_1 = arith.constant 0 : i32
    return %c0_i32, %c0_i32_0 : i32, i32
  }
  func.func @transform_2(%arg0: i32) -> (i32, i32) {
    %c0_i32 = arith.constant 0 : i32
    %c0_i32_0 = arith.constant 0 : i32
    %c0_i32_1 = arith.constant 0 : i32
    return %c0_i32, %c0_i32_0 : i32, i32
  }
  func.func @transform_3(%arg0: i32) -> (i32, i32) {
    %c0_i32 = arith.constant 0 : i32
    %c0_i32_0 = arith.constant 0 : i32
    %c0_i32_1 = arith.constant 0 : i32
    return %c0_i32, %c0_i32_0 : i32, i32
  }
  func.func @transform_4(%arg0: i32) -> (i32, i32) {
    %c0_i32 = arith.constant 0 : i32
    %c0_i32_0 = arith.constant 0 : i32
    %c0_i32_1 = arith.constant 0 : i32
    return %c0_i32, %c0_i32_0 : i32, i32
  }
  func.func @transform_5(%arg0: i32) -> (i32, i32) {
    %c0_i32 = arith.constant 0 : i32
    %c0_i32_0 = arith.constant 0 : i32
    %c0_i32_1 = arith.constant 0 : i32
    return %c0_i32, %c0_i32_0 : i32, i32
  }
  func.func @transform_6(%arg0: i32) -> (i32, i32) {
    %c0_i32 = arith.constant 0 : i32
    %c0_i32_0 = arith.constant 0 : i32
    %c0_i32_1 = arith.constant 0 : i32
    return %c0_i32, %c0_i32_0 : i32, i32
  }
  func.func @transform_7(%arg0: i32) -> (i32, i32) {
    %c0_i32 = arith.constant 0 : i32
    %c0_i32_0 = arith.constant 0 : i32
    return %arg0, %c0_i32 : i32, i32
  }
  func.func @transform_8(%arg0: i32) -> (i32, i32) {
    %c0_i32 = arith.constant 0 : i32
    %c0_i32_0 = arith.constant 0 : i32
    return %arg0, %c0_i32 : i32, i32
  }
}

</mosaic_0001>

<llo_original>
// kernel: tpu_custom_call.1
$region0: #{tpu_custom_call.1}
  #allocation0 [shape = 'u32[]', space=smem, size = 0x4, offset = 0x4, fixed_abs, tag = 'smem constant byte address 0x4 - core index']
  #allocation1 [shape = 'u32[72,128]{1,0:T(1,128)}', space=vmem, size = 0x9000, scoped, tag = 'internal scratch']
  %s0 = inlined_call_operand.hbm [shape: f32[16,16], index: 0, kind: input, shape index: {}]
  %s1 = inlined_call_operand.hbm [shape: f32[16,32], index: 1, kind: input, shape index: {}]
  %s2 = inlined_call_operand.vmem [shape: f32[1,32], index: 2, kind: input, shape index: {}]
  %s3 = inlined_call_operand.hbm [shape: f32[32,32], index: 3, kind: input, shape index: {}]
  %s4 = inlined_call_operand.hbm [shape: f32[1,32], index: 4, kind: input, shape index: {}]
  %s5 = inlined_call_operand.hbm [shape: f32[32,256], index: 5, kind: input, shape index: {}]
  %s6 = inlined_call_operand.vmem [shape: f32[1,256], index: 6, kind: input, shape index: {}]
  %s7 = inlined_call_operand.hbm [shape: f32[16,128], index: 7, kind: input, shape index: {}]
  %s8 = inlined_call_operand.hbm [shape: f32[16,128], index: 8, kind: output, shape index: {}]
  %s9 = sld [smem:[#allocation0]]
  $region66: #{tpu_custom_call.1} parent=0
    _
  %s11 = ssub.s32 1, %s9
  %s12 = scalar_select 0, %s11, %s9
  $region1: #{tpu_custom_call.1} parent=0
    #allocation2 [shape = 'u8[8192]{0}', space=vmem, size = 0x2000, scoped, tag = 'input window, operand 0, single buffered']
    #allocation3 [shape = 's32[1]{0}', space=sflag, size = 0x4, scoped, tag = 'scoped memory for tpu_custom_call.1']
    #allocation4 [shape = 's32[1]{0}', space=sflag, size = 0x4, scoped, tag = 'scoped memory for tpu_custom_call.1']
    #allocation5 [shape = 'u8[8192]{0}', space=vmem, size = 0x2000, scoped, tag = 'input window, operand 1, single buffered']
    #allocation6 [shape = 's32[1]{0}', space=sflag, size = 0x4, scoped, tag = 'scoped memory for tpu_custom_call.1']
    #allocation7 [shape = 'u8[16384]{0}', space=vmem, size = 0x4000, scoped, tag = 'input window, operand 3, single buffered']
    #allocation8 [shape = 'u8[512]{0}', space=vmem, size = 0x400, scoped, tag = 'input window, operand 4, single buffered']
    #allocation9 [shape = 's32[1]{0}', space=sflag, size = 0x4, scoped, tag = 'scoped memory for tpu_custom_call.1']
    #allocation10 [shape = 'u8[32768]{0}', space=vmem, size = 0x8000, scoped, tag = 'input window, operand 5, single buffered']
    #allocation11 [shape = 'u8[8192]{0}', space=vmem, size = 0x2000, scoped, tag = 'input window, operand 7, single buffered']
    #allocation12 [shape = 's32[1]{0}', space=sflag, size = 0x4, scoped, tag = 'scoped memory for tpu_custom_call.1']
    #allocation13 [shape = 'u8[8192]{0}', space=vmem, size = 0x2000, scoped, tag = 'output window, operand 0, single buffered']
    %13 = vsyncpa [#allocation3], 0
    %14 = vsyncpa [#allocation6], 0
    %15 = vsyncpa [#allocation9], 0
    %16 = vsyncpa [#allocation12], 0
    %17 = vsyncpa [#allocation4], 0
    // Predicated region
    $region2: #{tpu_custom_call.1} parent=1 // pred_check
      _
    $region3: #{tpu_custom_call.1} parent=1 // pred_check_branch
      %19 = sbr.rel (0) target = $region5
    $region4: #{tpu_custom_call.1} parent=1 // pred_region
      %21 = vsyncadd [#allocation3], 0
      %s22 = sshll.u32 %s0, 4
      %s23 = int_to_ptr.hbm [resolvable:$true] %s22
      %s24 = sshll.u32 [#allocation2], 4
      %s25 = int_to_ptr.vmem [resolvable:$true] %s24
      %30 = dma.hbm_to_vmem [thread:$0]  %s23, 256, %s25, [#allocation3], 128, 128, 8
    $region5: #{tpu_custom_call.1} parent=1 // pred_fallthru
      _
    // Predicated region
    $region6: #{tpu_custom_call.1} parent=1 // pred_check
      _
    $region7: #{tpu_custom_call.1} parent=1 // pred_check_branch
      %32 = sbr.rel (0) target = $region9
    $region8: #{tpu_custom_call.1} parent=1 // pred_region
      %34 = vsyncadd [#allocation6], 0
      %s35 = sshll.u32 %s1, 4
      %s36 = int_to_ptr.hbm [resolvable:$true] %s35
      %s37 = sshll.u32 [#allocation5], 4
      %s38 = int_to_ptr.vmem [resolvable:$true] %s37
      %43 = dma.hbm_to_vmem [thread:$0]  %s36, 256, %s38, [#allocation6], 128, 128, 8
    $region9: #{tpu_custom_call.1} parent=1 // pred_fallthru
      _
    // Predicated region
    $region10: #{tpu_custom_call.1} parent=1 // pred_check
      _
    $region11: #{tpu_custom_call.1} parent=1 // pred_check_branch
      %45 = sbr.rel (0) target = $region13
    $region12: #{tpu_custom_call.1} parent=1 // pred_region
      _
    $region13: #{tpu_custom_call.1} parent=1 // pred_fallthru
      _
    // Predicated region
    $region14: #{tpu_custom_call.1} parent=1 // pred_check
      _
    $region15: #{tpu_custom_call.1} parent=1 // pred_check_branch
      %47 = sbr.rel (0) target = $region17
    $region16: #{tpu_custom_call.1} parent=1 // pred_region
      %49 = vsyncadd [#allocation6], 0
      %s50 = sshll.u32 %s3, 4
      %s51 = int_to_ptr.hbm [resolvable:$true] %s50
      %s52 = sshll.u32 [#allocation7], 4
      %s53 = int_to_ptr.vmem [resolvable:$true] %s52
      %58 = dma.hbm_to_vmem [thread:$0]  %s51, 512, %s53, [#allocation6], 128, 128, 8
    $region17: #{tpu_custom_call.1} parent=1 // pred_fallthru
      _
    // Predicated region
    $region18: #{tpu_custom_call.1} parent=1 // pred_check
      _
    $region19: #{tpu_custom_call.1} parent=1 // pred_check_branch
      %60 = sbr.rel (0) target = $region21
    $region20: #{tpu_custom_call.1} parent=1 // pred_region
      %62 = vsyncadd [#allocation9], 0
      %s64 = sshll.u32 %s4, 4
      %s65 = int_to_ptr.hbm [resolvable:$true] %s64
      %s66 = sshll.u32 [#allocation8], 4
      %s67 = int_to_ptr.vmem [resolvable:$true] %s66
      %69 = dma.hbm_to_vmem [thread:$0]  %s65, 16, %s67, [#allocation9]
    $region21: #{tpu_custom_call.1} parent=1 // pred_fallthru
      _
    // Predicated region
    $region22: #{tpu_custom_call.1} parent=1 // pred_check
      _
    $region23: #{tpu_custom_call.1} parent=1 // pred_check_branch
      %71 = sbr.rel (0) target = $region25
    $region24: #{tpu_custom_call.1} parent=1 // pred_region
      %73 = vsyncadd [#allocation9], 0
      %s74 = sshll.u32 %s5, 4
      %s75 = int_to_ptr.hbm [resolvable:$true] %s74
      %s76 = sshll.u32 [#allocation10], 4
      %s77 = int_to_ptr.vmem [resolvable:$true] %s76
      %82 = dma.hbm_to_vmem [thread:$0]  %s75, 1024, %s77, [#allocation9], 256, 256, 16
    $region25: #{tpu_custom_call.1} parent=1 // pred_fallthru
      _
    // Predicated region
    $region26: #{tpu_custom_call.1} parent=1 // pred_check
      _
    $region27: #{tpu_custom_call.1} parent=1 // pred_check_branch
      %84 = sbr.rel (0) target = $region29
    $region28: #{tpu_custom_call.1} parent=1 // pred_region
      _
    $region29: #{tpu_custom_call.1} parent=1 // pred_fallthru
      _
    // Predicated region
    $region30: #{tpu_custom_call.1} parent=1 // pred_check
      _
    $region31: #{tpu_custom_call.1} parent=1 // pred_check_branch
      %86 = sbr.rel (0) target = $region33
    $region32: #{tpu_custom_call.1} parent=1 // pred_region
      %88 = vsyncadd [#allocation12], 0
      %s89 = sshll.u32 %s7, 4
      %s90 = int_to_ptr.hbm [resolvable:$true] %s89
      %s91 = sshll.u32 [#allocation11], 4
      %s92 = int_to_ptr.vmem [resolvable:$true] %s91
      %97 = dma.hbm_to_vmem [thread:$0]  %s90, 256, %s92, [#allocation12], 128, 128, 8
    $region33: #{tpu_custom_call.1} parent=1 // pred_fallthru
      _
    // Predicated region
    $region34: #{tpu_custom_call.1} parent=1 // pred_check
      _
    $region35: #{tpu_custom_call.1} parent=1 // pred_check_branch
      %99 = sbr.rel (0) target = $region37
    $region36: #{tpu_custom_call.1} parent=1 // pred_region
      %101 = dma.done [#allocation3], 256
    $region37: #{tpu_custom_call.1} parent=1 // pred_fallthru
      _
    // Predicated region
    $region38: #{tpu_custom_call.1} parent=1 // pred_check
      _
    $region39: #{tpu_custom_call.1} parent=1 // pred_check_branch
      %103 = sbr.rel (0) target = $region41
    $region40: #{tpu_custom_call.1} parent=1 // pred_region
      %105 = dma.done [#allocation6], 256
    $region41: #{tpu_custom_call.1} parent=1 // pred_fallthru
      _
    // Predicated region
    $region42: #{tpu_custom_call.1} parent=1 // pred_check
      _
    $region43: #{tpu_custom_call.1} parent=1 // pred_check_branch
      %107 = sbr.rel (0) target = $region45
    $region44: #{tpu_custom_call.1} parent=1 // pred_region
      %109 = dma.done [#allocation6], 512
    $region45: #{tpu_custom_call.1} parent=1 // pred_fallthru
      _
    // Predicated region
    $region46: #{tpu_custom_call.1} parent=1 // pred_check
      _
    $region47: #{tpu_custom_call.1} parent=1 // pred_check_branch
      %111 = sbr.rel (0) target = $region49
    $region48: #{tpu_custom_call.1} parent=1 // pred_region
      %113 = dma.done [#allocation9], 16
    $region49: #{tpu_custom_call.1} parent=1 // pred_fallthru
      _
    // Predicated region
    $region50: #{tpu_custom_call.1} parent=1 // pred_check
      _
    $region51: #{tpu_custom_call.1} parent=1 // pred_check_branch
      %115 = sbr.rel (0) target = $region53
    $region52: #{tpu_custom_call.1} parent=1 // pred_region
      %117 = dma.done [#allocation9], 1024
    $region53: #{tpu_custom_call.1} parent=1 // pred_fallthru
      _
    // Predicated region
    $region54: #{tpu_custom_call.1} parent=1 // pred_check
      _
    $region55: #{tpu_custom_call.1} parent=1 // pred_check_branch
      %119 = sbr.rel (0) target = $region57
    $region56: #{tpu_custom_call.1} parent=1 // pred_region
      %121 = dma.done [#allocation12], 256
    $region57: #{tpu_custom_call.1} parent=1 // pred_fallthru
      _
    %v122 = vld [vmem:[#allocation5] sm:$0xff]
    %v123 = vld [vmem:[#allocation5 + $0x8] sm:$0xff]
    %v124 = vld [vmem:[#allocation2] sm:$0xff]
    %v125 = vld [vmem:[#allocation2 + $0x8] sm:$0xff]
    %v126 = vld [vmem:[%s2] sm:$0x1]
    %v128 = vperm.slane %v126, 0
    %vm130 = vcmask 130048
    %v132 = vsel %vm130, %v124, 0
    %v135 = vsel %vm130, %v125, 0
    %137 = vmatpush.msra.mxu0 0.0
    %138 = vmatpush.msra.mxu0 0.0
    %139 = vmatpush.msra.mxu0 0.0
    %140 = vmatpush.msra.mxu0 0.0
    %141 = vmatpush.msra.mxu0 0.0
    %142 = vmatpush.msra.mxu0 0.0
    %143 = vmatpush.msra.mxu0 0.0
    %144 = vmatpush.msra.mxu0 0.0
    %145 = vmatpush.msra.mxu0 0.0
    %146 = vmatpush.msra.mxu0 0.0
    %147 = vmatpush.msra.mxu0 0.0
    %148 = vmatpush.msra.mxu0 0.0
    %149 = vmatpush.msra.mxu0 0.0
    %150 = vmatpush.msra.mxu0 0.0
    %151 = vmatpush.msra.mxu0 %v123
    %152 = vmatpush.msra.mxu0 %v122
    %153 = vmatmul.f32.gmra.mxu0 %v132
    %v154 = vpop.f32.mrf.mxu0
    %v155 = vadd.f32 %v128, %v154
    %156 = vmatmul.f32.gmra.mxu0 %v135
    %v157 = vpop.f32.mrf.mxu0
    %v158 = vadd.f32 %v128, %v157
    %159 = vdwg.mxu0
    %v160 = vmax.f32 %v155, 0.0
    %v161 = vmax.f32 %v158, 0.0
    %v162 = vld [vmem:[#allocation7] sm:$0xff]
    %v163 = vld [vmem:[#allocation7 + $0x8] sm:$0xff]
    %v164 = vld [vmem:[#allocation7 + $0x10] sm:$0xff]
    %v165 = vld [vmem:[#allocation7 + $0x18] sm:$0xff]
    %v166 = vld [vmem:[#allocation8] sm:$0x1]
    %v168 = vperm.slane %v166, 0
    %vm170 = vcmask 261120
    %v172 = vsel %vm170, %v160, 0
    %v175 = vsel %vm170, %v161, 0
    %177 = vmatpush.msra.mxu0 0.0
    %178 = vmatpush.msra.mxu0 0.0
    %179 = vmatpush.msra.mxu0 0.0
    %180 = vmatpush.msra.mxu0 0.0
    %181 = vmatpush.msra.mxu0 0.0
    %182 = vmatpush.msra.mxu0 0.0
    %183 = vmatpush.msra.mxu0 0.0
    %184 = vmatpush.msra.mxu0 0.0
    %185 = vmatpush.msra.mxu0 0.0
    %186 = vmatpush.msra.mxu0 0.0
    %187 = vmatpush.msra.mxu0 0.0
    %188 = vmatpush.msra.mxu0 0.0
    %189 = vmatpush.msra.mxu0 %v165
    %190 = vmatpush.msra.mxu0 %v164
    %191 = vmatpush.msra.mxu0 %v163
    %192 = vmatpush.msra.mxu0 %v162
    %193 = vmatmul.f32.gmra.mxu0 %v172
    %v194 = vpop.f32.mrf.mxu0
    %v195 = vadd.f32 %v168, %v194
    %196 = vmatmul.f32.gmra.mxu0 %v175
    %v197 = vpop.f32.mrf.mxu0
    %v198 = vadd.f32 %v168, %v197
    %199 = vdwg.mxu0
    %v200 = vmax.f32 %v195, 0.0
    %v201 = vmax.f32 %v198, 0.0
    %v202 = vld [vmem:[#allocation10] sm:$0xff]
    %v203 = vld [vmem:[#allocation10 + $0x8] sm:$0xff]
    %v204 = vld [vmem:[#allocation10 + $0x10] sm:$0xff]
    %v205 = vld [vmem:[#allocation10 + $0x18] sm:$0xff]
    %v206 = vld [vmem:[#allocation10 + $0x20] sm:$0xff]
    %v207 = vld [vmem:[#allocation10 + $0x28] sm:$0xff]
    %v208 = vld [vmem:[#allocation10 + $0x30] sm:$0xff]
    %v209 = vld [vmem:[#allocation10 + $0x38] sm:$0xff]
    %v210 = vld [vmem:[%s6] sm:$0x3]
    %v212 = vperm.slane %v210, 0
    %v213 = vperm.slane %v210, 1
    %v217 = vsel %vm170, %v200, 0
    %v220 = vsel %vm170, %v201, 0
    %222 = vmatpush.msra.mxu0 0.0
    %223 = vmatpush.msra.mxu0 0.0
    %224 = vmatpush.msra.mxu0 0.0
    %225 = vmatpush.msra.mxu0 0.0
    %226 = vmatpush.msra.mxu0 0.0
    %227 = vmatpush.msra.mxu0 0.0
    %228 = vmatpush.msra.mxu0 0.0
    %229 = vmatpush.msra.mxu0 0.0
    %230 = vmatpush.msra.mxu0 0.0
    %231 = vmatpush.msra.mxu0 0.0
    %232 = vmatpush.msra.mxu0 0.0
    %233 = vmatpush.msra.mxu0 0.0
    %234 = vmatpush.msra.mxu0 %v208
    %235 = vmatpush.msra.mxu0 %v206
    %236 = vmatpush.msra.mxu0 %v204
    %237 = vmatpush.msra.mxu0 %v202
    %238 = vmatmul.f32.gmra.mxu0 %v217
    %v239 = vpop.f32.mrf.mxu0
    %v240 = vadd.f32 %v212, %v239
    %241 = vmatmul.f32.gmra.mxu0 %v220
    %v242 = vpop.f32.mrf.mxu0
    %v243 = vadd.f32 %v212, %v242
    %244 = vdwg.mxu0
    %245 = vmatpush.msra.mxu0 0.0
    %246 = vmatpush.msra.mxu0 0.0
    %247 = vmatpush.msra.mxu0 0.0
    %248 = vmatpush.msra.mxu0 0.0
    %249 = vmatpush.msra.mxu0 0.0
    %250 = vmatpush.msra.mxu0 0.0
    %251 = vmatpush.msra.mxu0 0.0
    %252 = vmatpush.msra.mxu0 0.0
    %253 = vmatpush.msra.mxu0 0.0
    %254 = vmatpush.msra.mxu0 0.0
    %255 = vmatpush.msra.mxu0 0.0
    %256 = vmatpush.msra.mxu0 0.0
    %257 = vmatpush.msra.mxu0 %v209
    %258 = vmatpush.msra.mxu0 %v207
    %259 = vmatpush.msra.mxu0 %v205
    %260 = vmatpush.msra.mxu0 %v203
    %261 = vmatmul.f32.gmra.mxu0 %v217
    %v262 = vpop.f32.mrf.mxu0
    %v263 = vadd.f32 %v213, %v262
    %264 = vmatmul.f32.gmra.mxu0 %v220
    %v265 = vpop.f32.mrf.mxu0
    %v266 = vadd.f32 %v213, %v265
    %267 = vdwg.mxu0
    %v268 = vmax.f32 %v263, -20.0
    %v269 = vmax.f32 %v266, -20.0
    %v270 = vmin.f32 %v268, 2.0
    %v271 = vmin.f32 %v269, 2.0
    %v272 = vmul.f32 %v270, 1.442695
    %v273 = vpow.pop %v272
    %v274 = vmul.f32 %v271, 1.442695
    %v275 = vpow.pop %v274
    %v276 = vld [vmem:[#allocation11] sm:$0xff]
    %v277 = vld [vmem:[#allocation11 + $0x8] sm:$0xff]
    %v278 = vmul.f32 %v273, %v276
    %v279 = vmul.f32 %v275, %v277
    %v280 = vadd.f32 %v240, %v278
    %v281 = vadd.f32 %v243, %v279
    %v282 = vsub.f32 0.6931472, %v280
    %v283 = vsub.f32 0.6931472, %v281
    %v284 = vmul.f32 %v280, -2.0
    %v285 = vmul.f32 %v281, -2.0
    %v286 = vmax.f32 %v284, 0.0
    %v287 = vmax.f32 %v285, 0.0
    %v288 = vand.u32 2147483647, %v284
    %v289 = vand.u32 2147483647, %v285
    %v290 = vsub.f32 0.0, %v288
    %v291 = vsub.f32 0.0, %v289
    %v292 = vmul.f32 %v290, 1.442695
    %v293 = vpow.pop %v292
    %v294 = vmul.f32 %v291, 1.442695
    %v295 = vpow.pop %v294
    %v296 = vadd.f32 %v293, 1.0
    %v297 = vlog2.pop %v296
    %v298 = vmul.f32 %v297, 0.6931472
    %v299 = vmul.f32 -0.5, %v293
    %v300 = vadd.f32 %v299, 1.0
    %v301 = vmul.f32 %v300, %v293
    %v302 = vand.u32 2147483647, %v293
    %vm303 = vcmp.lt.f32.partialorder %v302, 0.0004427343
    %v304 = vsel %vm303, %v301, %v298
    %v305 = vadd.f32 %v295, 1.0
    %v306 = vlog2.pop %v305
    %v307 = vmul.f32 %v306, 0.6931472
    %v308 = vmul.f32 -0.5, %v295
    %v309 = vadd.f32 %v308, 1.0
    %v310 = vmul.f32 %v309, %v295
    %v311 = vand.u32 2147483647, %v295
    %vm312 = vcmp.lt.f32.partialorder %v311, 0.0004427343
    %v313 = vsel %vm312, %v310, %v307
    %v314 = vadd.f32 %v286, %v304
    %v315 = vadd.f32 %v287, %v313
    %v316 = vsub.f32 %v282, %v314
    %v317 = vsub.f32 %v283, %v315
    %v318 = vmul.f32 %v316, 2.0
    %v319 = vmul.f32 %v317, 2.0
    %v320 = vmul.f32 %v276, -0.5
    %v321 = vmul.f32 %v277, -0.5
    %v322 = vmul.f32 %v320, %v276
    %v323 = vmul.f32 %v321, %v277
    %v324 = vsub.f32 %v322, %v270
    %v325 = vsub.f32 %v323, %v271
    %v326 = vsub.f32 %v324, 0.9189385
    %v327 = vsub.f32 %v325, 0.9189385
    %v328 = vsub.f32 %v326, %v318
    %v329 = vsub.f32 %v327, %v319
    %v330 = vlaneseq
    %v331 = vand.u32 %v330, 127
    %vm332 = vcmp.lt.s32.totalorder %v331, 8
    %v333 = vsel %vm332, %v328, 0.0
    %v334 = vsel %vm332, %v329, 0.0
    %335 = vadd.xlane.f32.xlu0 %v333
    %v336 = vpop.xlane.xlu0 %335
    %337 = vadd.xlane.f32.xlu0 %v334
    %v338 = vpop.xlane.xlu0 %337
    %v339 = vtanh.pop %v280
    %v340 = vtanh.pop %v281
    %vm341 = vcmp.eq.s32.totalorder %v331, 8
    %v342 = vsel %vm341, %v336, 0.0
    %v343 = vsel %vm341, %v338, 0.0
    %v344 = vsel %vm332, %v339, %v342
    %v345 = vsel %vm332, %v340, %v343
    %346 = vst [vmem:[#allocation13] sm:$0xff] %v344
    %347 = vst [vmem:[#allocation13 + $0x8] sm:$0xff] %v345
    // Predicated region
    $region58: #{tpu_custom_call.1} parent=1 // pred_check
      _
    $region59: #{tpu_custom_call.1} parent=1 // pred_check_branch
      %349 = sbr.rel (0) target = $region61
    $region60: #{tpu_custom_call.1} parent=1 // pred_region
      %351 = vsyncadd [#allocation4], 0
      %s352 = sshll.u32 [#allocation13], 4
      %s353 = int_to_ptr.vmem [resolvable:$true] %s352
      %s354 = sshll.u32 %s8, 4
      %s355 = int_to_ptr.hbm [resolvable:$true] %s354
      %360 = dma.vmem_to_hbm [thread:$0]  %s353, 256, %s355, [#allocation4], 128, 128, 8
    $region61: #{tpu_custom_call.1} parent=1 // pred_fallthru
      _
    // Predicated region
    $region62: #{tpu_custom_call.1} parent=1 // pred_check
      _
    $region63: #{tpu_custom_call.1} parent=1 // pred_check_branch
      %362 = sbr.rel (0) target = $region65
    $region64: #{tpu_custom_call.1} parent=1 // pred_region
      %364 = dma.done [#allocation4], 256
    $region65: #{tpu_custom_call.1} parent=1 // pred_fallthru
      _
    %365 = vsyncpa [#allocation3], 1
    %366 = vsyncpa [#allocation6], 1
    %367 = vsyncpa [#allocation9], 1
    %368 = vsyncpa [#allocation12], 1
    %369 = vsyncpa [#allocation4], 1

</llo_original>
